<compile_context>
chip_gen: v7x
topology: tpu7x:2x2x1
jax: 0.10.0
libtpu: 0.0.40
codegen_flags: <defaults>
</compile_context>

<pallas_src>
import functools

import jax
import jax.numpy as jnp
from jax.experimental import pallas as pl
from jax.experimental.pallas import tpu as pltpu


def _round_up(n, m):
    return (n + m - 1) // m * m


def _choose_batch_tile(batch, block_rows):
    """Lane-aligned batch tile (multiple of 128).

    Guarantees:
      * batch is padded by at most 127 rows (padding target is the next multiple
        of 128, never a multiple of a large tile),
      * the tile divides the padded batch exactly (no ragged last tile),
      * >= 2 grid steps whenever the padded batch allows it (v7x megacore),
      * tiles stay as large as `block_rows` allows (single-TC v5e/v6e: fewer
        grid steps -> less per-step overhead).
    """
    b_pad = _round_up(max(batch, 1), 128)
    n128 = b_pad // 128
    cap = max(1, min(block_rows // 128, n128))
    if n128 >= 2:
        cap = max(1, min(cap, n128 // 2))   # at least 2 grid steps
    tile128 = 1
    for c in range(cap, 0, -1):             # largest divisor of n128 <= cap
        if n128 % c == 0:
            tile128 = c
            break
    return 128 * tile128, b_pad


def _proposal_kernel(x_ref, w1t_ref, b1t_ref, w2t_ref, b2t_ref,
                     pm_ref, ps_ref, out_ref, *, out_dim):
    # x tile arrives f32; cast to bf16 in-kernel (cheap VPU op hidden under the DMA).
    x_bf16 = x_ref[...].astype(jnp.bfloat16)                       # (in_dim, tb)

    # Layer 1 (transposed): h^T = relu(W1^T @ x^T + b1^T) -> (hidden, tb), batch on lanes.
    h = jnp.dot(w1t_ref[...], x_bf16, preferred_element_type=jnp.float32)
    h = jnp.maximum(h + b1t_ref[...], 0.0)

    # Layer 2 (fused mean/stddev): y^T = W2^T @ h^T + b2^T -> (2D, tb).
    y = jnp.dot(w2t_ref[...], h.astype(jnp.bfloat16),
                preferred_element_type=jnp.float32) + b2t_ref[...]

    # Mean/stddev split is a sublane slice (offset D) -> free; lane axis untouched.
    ym = y[:out_dim, :]
    ys = y[out_dim:, :]

    pm = pm_ref[...]
    ps = ps_ref[...]
    # Fused output slab: out[0] = means, out[1] = stddevs.  Lane-dense f32 stores.
    out_ref[0] = pm + ym * ps
    out_ref[1] = jnp.exp(ys) * ps


def proposal_normal_normal_forward(x, params, prior_means, prior_stddevs,
                                   output_shape, *, block_rows=512):
    """Returns (means, stddevs) of the proposal Normal, shaped (-1,) + output_shape."""
    w1, b1, w2, b2 = params
    batch = x.shape[0]
    x_flat = x.reshape(batch, -1)
    input_dim = x_flat.shape[1]
    hidden = w1.shape[1]
    D = prior_means.reshape(batch, -1).shape[1]

    tb, b_pad = _choose_batch_tile(batch, block_rows)
    grid = (b_pad // tb,)

    # Batch-on-lanes layout: batched operands are passed transposed (layout plumbing in
    # the wrapper), x stays f32 (bf16 cast happens inside the kernel).
    x_t = jnp.transpose(x_flat).astype(jnp.float32)                      # (in_dim, batch)
    pm_t = jnp.transpose(prior_means.reshape(batch, -1)).astype(jnp.float32)   # (D, batch)
    ps_t = jnp.transpose(prior_stddevs.reshape(batch, -1)).astype(jnp.float32)
    if b_pad != batch:
        pad = ((0, 0), (0, b_pad - batch))
        x_t = jnp.pad(x_t, pad)
        pm_t = jnp.pad(pm_t, pad)
        ps_t = jnp.pad(ps_t, pad)

    # Resident weights (tiny): transposed once, MXU operands in bf16; biases stay f32.
    w1_t = jnp.transpose(w1).astype(jnp.bfloat16)                        # (hidden, in_dim)
    w2_t = jnp.transpose(w2).astype(jnp.bfloat16)                        # (2D, hidden), fused
    b1_t = jnp.reshape(b1, (hidden, 1)).astype(jnp.float32)              # (hidden, 1)
    b2_t = jnp.reshape(b2, (2 * D, 1)).astype(jnp.float32)               # (2D, 1)

    batched = lambda i: (0, i)
    resident = lambda i: (0, 0)

    cost = pl.CostEstimate(
        flops=int(2 * b_pad * (input_dim * hidden + hidden * 2 * D)),
        transcendentals=int(b_pad * D),
        bytes_accessed=int(
            x_t.size * 4 + w1_t.size * 2 + w2_t.size * 2
            + (b1_t.size + b2_t.size) * 4
            + (pm_t.size + ps_t.size) * 4
            + 2 * b_pad * D * 4))

    kernel = functools.partial(_proposal_kernel, out_dim=D)

    # VMEM budget (per step, double-buffered): x tile + priors + output slab + resident
    # weights -- a few hundred KiB at these sizes; 48 MiB cap is safe on v7x's 64 MiB.
    out = pl.pallas_call(
        kernel,
        out_shape=jax.ShapeDtypeStruct((2, D, b_pad), jnp.float32),
        grid=grid,
        in_specs=[
            pl.BlockSpec((input_dim, tb), batched),      # x^T tile (f32)
            pl.BlockSpec((hidden, input_dim), resident),  # W1^T (resident, bf16)
            pl.BlockSpec((hidden, 1), resident),          # b1^T
            pl.BlockSpec((2 * D, hidden), resident),      # W2^T (fused, resident, bf16)
            pl.BlockSpec((2 * D, 1), resident),           # b2^T
            pl.BlockSpec((D, tb), batched),               # prior means^T tile
            pl.BlockSpec((D, tb), batched),               # prior stddevs^T tile
        ],
        out_specs=pl.BlockSpec((2, D, tb), lambda i: (0, 0, i)),
        compiler_params=pltpu.CompilerParams(
            dimension_semantics=("parallel",),
            vmem_limit_bytes=48 * 1024 * 1024),
        cost_estimate=cost,
    )(x_t, w1_t, b1_t, w2_t, b2_t, pm_t, ps_t)

    means = jnp.transpose(out[0, :, :batch])       # (batch, D)
    stddevs = jnp.transpose(out[1, :, :batch])
    out_shape_full = (-1,) + tuple(output_shape)
    # TODO(synk): returning (means, stddevs) arrays instead of a Normal distribution object.
    return means.reshape(out_shape_full), stddevs.reshape(out_shape_full)


def init_params(key, input_dim, output_dim):
    """EmbeddingFeedForward(num_layers=2): Linear(in, hid) -> relu -> Linear(hid, 2*D)."""
    ff_out = 2 * output_dim
    hidden = int((input_dim + ff_out) / 2)
    k1, k2, k3, k4 = jax.random.split(key, 4)
    scale1 = 1.0 / jnp.sqrt(input_dim)
    scale2 = 1.0 / jnp.sqrt(hidden)
    w1 = jax.random.uniform(k1, (input_dim, hidden), jnp.float32, -scale1, scale1)
    b1 = jax.random.uniform(k2, (1, hidden), jnp.float32, -scale1, scale1)
    w2 = jax.random.uniform(k3, (hidden, ff_out), jnp.float32, -scale2, scale2)
    b2 = jax.random.uniform(k4, (1, ff_out), jnp.float32, -scale2, scale2)
    return w1, b1, w2, b2


if __name__ == "__main__":
    key = jax.random.PRNGKey(0)
    k_x, k_p, k_pm, k_ps = jax.random.split(key, 4)

    # Small shapes consistent with the module:
    #   input_shape = (4, 8)  -> input_dim = 32
    #   output_shape = (16,)  -> output_dim D = 16
    batch = 8
    input_shape = (4, 8)
    output_shape = (16,)
    input_dim = 4 * 8
    output_dim = 16

    x = jax.random.normal(k_x, (batch,) + input_shape, jnp.float32)
    params = init_params(k_p, input_dim, output_dim)

    # Priors: one Normal per latent variable, stacked/reshaped to (batch, D).
    prior_means = jax.random.normal(k_pm, (batch, output_dim), jnp.float32)
    prior_stddevs = jnp.exp(
        0.1 * jax.random.normal(k_ps, (batch, output_dim), jnp.float32))

    means, stddevs = proposal_normal_normal_forward(
        x, params, prior_means, prior_stddevs, output_shape)
    jax.block_until_ready((means, stddevs))

    w1, b1, w2, b2 = params
    D = output_dim
    xf = x.reshape(batch, -1)

    # Reference 1: bf16-matched math (same casts as the kernel) -> tight tolerance.
    hb = jnp.maximum(
        jnp.dot(xf.astype(jnp.bfloat16), w1.astype(jnp.bfloat16),
                preferred_element_type=jnp.float32) + b1, 0.0).astype(jnp.bfloat16)
    yb = jnp.dot(hb, w2.astype(jnp.bfloat16),
                 preferred_element_type=jnp.float32) + b2
    ref_means_bf = (prior_means + yb[:, :D] * prior_stddevs).reshape(
        (-1,) + output_shape)
    ref_stddevs_bf = (jnp.exp(yb[:, D:]) * prior_stddevs).reshape(
        (-1,) + output_shape)

    # Reference 2: original full-f32 semantics -> loose tolerance (bf16 matmul operands).
    h32 = jnp.maximum(xf @ w1 + b1, 0.0)
    y32 = h32 @ w2 + b2
    ref_means_f32 = (prior_means + y32[:, :D] * prior_stddevs).reshape(
        (-1,) + output_shape)
    ref_stddevs_f32 = (jnp.exp(y32[:, D:]) * prior_stddevs).reshape(
        (-1,) + output_shape)

    assert means.shape == (batch,) + output_shape
    assert stddevs.shape == (batch,) + output_shape
    assert jnp.allclose(means, ref_means_bf, atol=2e-4, rtol=2e-4)
    assert jnp.allclose(stddevs, ref_stddevs_bf, atol=2e-4, rtol=2e-4)
    assert jnp.allclose(means, ref_means_f32, atol=5e-2, rtol=5e-2)
    assert jnp.allclose(stddevs, ref_stddevs_f32, atol=5e-2, rtol=5e-2)
    assert bool(jnp.all(stddevs > 0))

    print("KERNEL_OK")
</pallas_src>

<mosaic_0001>
module attributes {stable_mosaic.version = 11 : i64} {
  func.func @_proposal_kernel(%arg0: i32, %arg1: memref<32x128xf32, #tpu.memory_space<vmem>>, %arg2: memref<32x32xbf16, #tpu.memory_space<vmem>>, %arg3: memref<32x1xf32, #tpu.memory_space<vmem>>, %arg4: memref<32x32xbf16, #tpu.memory_space<vmem>>, %arg5: memref<32x1xf32, #tpu.memory_space<vmem>>, %arg6: memref<16x128xf32, #tpu.memory_space<vmem>>, %arg7: memref<16x128xf32, #tpu.memory_space<vmem>>, %arg8: memref<2x16x128xf32, #tpu.memory_space<vmem>>) attributes {dimension_semantics = [#tpu.dimension_semantics<parallel>], iteration_bounds = array<i64: 1>, scalar_prefetch = 0 : i64, scratch_operands = 0 : i64, tpu.core_type = #tpu.core_type<tc>, window_params = [{transform_indices = @transform_0, window_bounds = array<i64: 32, 128>}, {pipeline_mode = #tpu.pipeline_mode<synchronous>, transform_indices = @transform_1, window_bounds = array<i64: 32, 32>}, {pipeline_mode = #tpu.pipeline_mode<synchronous>, transform_indices = @transform_2, window_bounds = array<i64: 32, 1>}, {pipeline_mode = #tpu.pipeline_mode<synchronous>, transform_indices = @transform_3, window_bounds = array<i64: 32, 32>}, {pipeline_mode = #tpu.pipeline_mode<synchronous>, transform_indices = @transform_4, window_bounds = array<i64: 32, 1>}, {transform_indices = @transform_5, window_bounds = array<i64: 16, 128>}, {transform_indices = @transform_6, window_bounds = array<i64: 16, 128>}, {transform_indices = @transform_7, window_bounds = array<i64: 2, 16, 128>}]} {
    %c0 = arith.constant 0 : index
    %c0_0 = arith.constant 0 : index
    %0 = vector.load %arg1[%c0, %c0_0] : memref<32x128xf32, #tpu.memory_space<vmem>>, vector<32x128xf32>
    %1 = arith.truncf %0 : vector<32x128xf32> to vector<32x128xbf16>
    %c0_1 = arith.constant 0 : index
    %c0_2 = arith.constant 0 : index
    %2 = vector.load %arg2[%c0_1, %c0_2] : memref<32x32xbf16, #tpu.memory_space<vmem>>, vector<32x32xbf16>
    %cst = arith.constant dense<0.000000e+00> : vector<32x128xf32>
    %3 = tpu.matmul %2, %1, %cst {dimension_numbers = #tpu.dot_dimension_numbers<[1], [0], [0], [1], [0, 0, 1, 1], [], []>} : vector<32x32xbf16>, vector<32x128xbf16>, vector<32x128xf32> -> vector<32x128xf32>
    %c0_3 = arith.constant 0 : index
    %c0_4 = arith.constant 0 : index
    %4 = vector.load %arg3[%c0_3, %c0_4] : memref<32x1xf32, #tpu.memory_space<vmem>>, vector<32x1xf32>
    %5 = vector.broadcast %4 : vector<32x1xf32> to vector<32x128xf32>
    %6 = arith.addf %3, %5 : vector<32x128xf32>
    %cst_5 = arith.constant 0.000000e+00 : f32
    %7 = vector.broadcast %cst_5 : f32 to vector<32x128xf32>
    %8 = arith.maximumf %6, %7 : vector<32x128xf32>
    %c0_6 = arith.constant 0 : index
    %c0_7 = arith.constant 0 : index
    %9 = vector.load %arg4[%c0_6, %c0_7] : memref<32x32xbf16, #tpu.memory_space<vmem>>, vector<32x32xbf16>
    %10 = arith.truncf %8 : vector<32x128xf32> to vector<32x128xbf16>
    %cst_8 = arith.constant dense<0.000000e+00> : vector<32x128xf32>
    %11 = tpu.matmul %9, %10, %cst_8 {dimension_numbers = #tpu.dot_dimension_numbers<[1], [0], [0], [1], [0, 0, 1, 1], [], []>} : vector<32x32xbf16>, vector<32x128xbf16>, vector<32x128xf32> -> vector<32x128xf32>
    %c0_9 = arith.constant 0 : index
    %c0_10 = arith.constant 0 : index
    %12 = vector.load %arg5[%c0_9, %c0_10] : memref<32x1xf32, #tpu.memory_space<vmem>>, vector<32x1xf32>
    %13 = vector.broadcast %12 : vector<32x1xf32> to vector<32x128xf32>
    %14 = arith.addf %11, %13 : vector<32x128xf32>
    %15 = vector.extract_strided_slice %14 {offsets = [0, 0], sizes = [16, 128], strides = [1, 1]} : vector<32x128xf32> to vector<16x128xf32>
    %16 = vector.extract_strided_slice %14 {offsets = [16, 0], sizes = [16, 128], strides = [1, 1]} : vector<32x128xf32> to vector<16x128xf32>
    %c0_11 = arith.constant 0 : index
    %c0_12 = arith.constant 0 : index
    %17 = vector.load %arg6[%c0_11, %c0_12] : memref<16x128xf32, #tpu.memory_space<vmem>>, vector<16x128xf32>
    %c0_13 = arith.constant 0 : index
    %c0_14 = arith.constant 0 : index
    %18 = vector.load %arg7[%c0_13, %c0_14] : memref<16x128xf32, #tpu.memory_space<vmem>>, vector<16x128xf32>
    %19 = arith.mulf %15, %18 : vector<16x128xf32>
    %20 = arith.addf %17, %19 : vector<16x128xf32>
    %c0_15 = arith.constant 0 : index
    %c0_16 = arith.constant 0 : index
    %c0_17 = arith.constant 0 : index
    %21 = vector.load %arg8[%c0_15, %c0_16, %c0_17] : memref<2x16x128xf32, #tpu.memory_space<vmem>>, vector<1x16x128xf32>
    %22 = vector.shape_cast %21 : vector<1x16x128xf32> to vector<16x128xf32>
    %23 = vector.shape_cast %20 : vector<16x128xf32> to vector<1x16x128xf32>
    tpu.vector_store %arg8[%c0_15, %c0_16, %c0_17], %23 {strides = array<i32>} : memref<2x16x128xf32, #tpu.memory_space<vmem>>, vector<1x16x128xf32>,
    %24 = math.exp %16 : vector<16x128xf32>
    %25 = arith.mulf %24, %18 : vector<16x128xf32>
    %c1 = arith.constant 1 : index
    %c0_18 = arith.constant 0 : index
    %c0_19 = arith.constant 0 : index
    %26 = vector.load %arg8[%c1, %c0_18, %c0_19] : memref<2x16x128xf32, #tpu.memory_space<vmem>>, vector<1x16x128xf32>
    %27 = vector.shape_cast %26 : vector<1x16x128xf32> to vector<16x128xf32>
    %28 = vector.shape_cast %25 : vector<16x128xf32> to vector<1x16x128xf32>
    tpu.vector_store %arg8[%c1, %c0_18, %c0_19], %28 {strides = array<i32>} : memref<2x16x128xf32, #tpu.memory_space<vmem>>, vector<1x16x128xf32>,
    return
  }
  func.func @transform_0(%arg0: i32) -> (i32, i32) {
    %c0_i32 = arith.constant 0 : i32
    %c0_i32_0 = arith.constant 0 : i32
    return %c0_i32, %arg0 : i32, i32
  }
  func.func @transform_1(%arg0: i32) -> (i32, i32) {
    %c0_i32 = arith.constant 0 : i32
    %c0_i32_0 = arith.constant 0 : i32
    %c0_i32_1 = arith.constant 0 : i32
    return %c0_i32, %c0_i32_0 : i32, i32
  }
  func.func @transform_2(%arg0: i32) -> (i32, i32) {
    %c0_i32 = arith.constant 0 : i32
    %c0_i32_0 = arith.constant 0 : i32
    %c0_i32_1 = arith.constant 0 : i32
    return %c0_i32, %c0_i32_0 : i32, i32
  }
  func.func @transform_3(%arg0: i32) -> (i32, i32) {
    %c0_i32 = arith.constant 0 : i32
    %c0_i32_0 = arith.constant 0 : i32
    %c0_i32_1 = arith.constant 0 : i32
    return %c0_i32, %c0_i32_0 : i32, i32
  }
  func.func @transform_4(%arg0: i32) -> (i32, i32) {
    %c0_i32 = arith.constant 0 : i32
    %c0_i32_0 = arith.constant 0 : i32
    %c0_i32_1 = arith.constant 0 : i32
    return %c0_i32, %c0_i32_0 : i32, i32
  }
  func.func @transform_5(%arg0: i32) -> (i32, i32) {
    %c0_i32 = arith.constant 0 : i32
    %c0_i32_0 = arith.constant 0 : i32
    return %c0_i32, %arg0 : i32, i32
  }
  func.func @transform_6(%arg0: i32) -> (i32, i32) {
    %c0_i32 = arith.constant 0 : i32
    %c0_i32_0 = arith.constant 0 : i32
    return %c0_i32, %arg0 : i32, i32
  }
  func.func @transform_7(%arg0: i32) -> (i32, i32, i32) {
    %c0_i32 = arith.constant 0 : i32
    %c0_i32_0 = arith.constant 0 : i32
    %c0_i32_1 = arith.constant 0 : i32
    return %c0_i32, %c0_i32_0, %arg0 : i32, i32, i32
  }
}

</mosaic_0001>

<llo_original>
// kernel: tpu_custom_call.1
$region0: #{tpu_custom_call.1}
  #allocation0 [shape = 'u32[]', space=smem, size = 0x4, offset = 0x4, fixed_abs, tag = 'smem constant byte address 0x4 - core index']
  #allocation1 [shape = 'u32[144,128]{1,0:T(1,128)}', space=vmem, size = 0x12000, scoped, tag = 'internal scratch']
  %s0 = inlined_call_operand.vmem [shape: f32[32,128], index: 0, kind: input, shape index: {}]
  %s1 = inlined_call_operand.vmem [shape: bf16[32,32], index: 1, kind: input, shape index: {}]
  %s2 = inlined_call_operand.vmem [shape: f32[32,1], index: 2, kind: input, shape index: {}]
  %s3 = inlined_call_operand.vmem [shape: bf16[32,32], index: 3, kind: input, shape index: {}]
  %s4 = inlined_call_operand.vmem [shape: f32[32,1], index: 4, kind: input, shape index: {}]
  %s5 = inlined_call_operand.vmem [shape: f32[16,128], index: 5, kind: input, shape index: {}]
  %s6 = inlined_call_operand.hbm [shape: f32[16,128], index: 6, kind: input, shape index: {}]
  %s7 = inlined_call_operand.hbm [shape: f32[2,16,128], index: 7, kind: output, shape index: {}]
  %s8 = sld [smem:[#allocation0]]
  $region42: #{tpu_custom_call.1} parent=0
    _
  %s10 = ssub.s32 1, %s8
  %s11 = scalar_select 0, %s10, %s8
  $region1: #{tpu_custom_call.1} parent=0
    #allocation2 [shape = 'u8[8192]{0}', space=vmem, size = 0x2000, scoped, tag = 'input window, operand 6, single buffered']
    #allocation3 [shape = 's32[1]{0}', space=sflag, size = 0x4, scoped, tag = 'scoped memory for tpu_custom_call.1']
    #allocation4 [shape = 's32[1]{0}', space=sflag, size = 0x4, scoped, tag = 'scoped memory for tpu_custom_call.1']
    #allocation5 [shape = 'u8[16384]{0}', space=vmem, size = 0x4000, scoped, tag = 'output window, operand 0, single buffered']
    %12 = vsyncpa [#allocation3], 0
    %13 = vsyncpa [#allocation4], 0
    // Predicated region
    $region2: #{tpu_custom_call.1} parent=1 // pred_check
      _
    $region3: #{tpu_custom_call.1} parent=1 // pred_check_branch
      %15 = sbr.rel (0) target = $region5
    $region4: #{tpu_custom_call.1} parent=1 // pred_region
      _
    $region5: #{tpu_custom_call.1} parent=1 // pred_fallthru
      _
    // Predicated region
    $region6: #{tpu_custom_call.1} parent=1 // pred_check
      _
    $region7: #{tpu_custom_call.1} parent=1 // pred_check_branch
      %17 = sbr.rel (0) target = $region9
    $region8: #{tpu_custom_call.1} parent=1 // pred_region
      _
    $region9: #{tpu_custom_call.1} parent=1 // pred_fallthru
      _
    // Predicated region
    $region10: #{tpu_custom_call.1} parent=1 // pred_check
      _
    $region11: #{tpu_custom_call.1} parent=1 // pred_check_branch
      %19 = sbr.rel (0) target = $region13
    $region12: #{tpu_custom_call.1} parent=1 // pred_region
      _
    $region13: #{tpu_custom_call.1} parent=1 // pred_fallthru
      _
    // Predicated region
    $region14: #{tpu_custom_call.1} parent=1 // pred_check
      _
    $region15: #{tpu_custom_call.1} parent=1 // pred_check_branch
      %21 = sbr.rel (0) target = $region17
    $region16: #{tpu_custom_call.1} parent=1 // pred_region
      _
    $region17: #{tpu_custom_call.1} parent=1 // pred_fallthru
      _
    // Predicated region
    $region18: #{tpu_custom_call.1} parent=1 // pred_check
      _
    $region19: #{tpu_custom_call.1} parent=1 // pred_check_branch
      %23 = sbr.rel (0) target = $region21
    $region20: #{tpu_custom_call.1} parent=1 // pred_region
      _
    $region21: #{tpu_custom_call.1} parent=1 // pred_fallthru
      _
    // Predicated region
    $region22: #{tpu_custom_call.1} parent=1 // pred_check
      _
    $region23: #{tpu_custom_call.1} parent=1 // pred_check_branch
      %25 = sbr.rel (0) target = $region25
    $region24: #{tpu_custom_call.1} parent=1 // pred_region
      _
    $region25: #{tpu_custom_call.1} parent=1 // pred_fallthru
      _
    // Predicated region
    $region26: #{tpu_custom_call.1} parent=1 // pred_check
      _
    $region27: #{tpu_custom_call.1} parent=1 // pred_check_branch
      %27 = sbr.rel (0) target = $region29
    $region28: #{tpu_custom_call.1} parent=1 // pred_region
      %s29 = ssub.s32 256, 256
      %30 = vsyncadd [#allocation3], %s29
      %s31 = sshll.u32 [#allocation2], 4
      %s32 = int_to_ptr.vmem [resolvable:$true] %s31
      %37 = dma.hbm_to_vmem [thread:$0]  %s6, 256, %s32, [#allocation3], 128, 128, 8
    $region29: #{tpu_custom_call.1} parent=1 // pred_fallthru
      _
    // Predicated region
    $region30: #{tpu_custom_call.1} parent=1 // pred_check
      _
    $region31: #{tpu_custom_call.1} parent=1 // pred_check_branch
      %39 = sbr.rel (0) target = $region33
    $region32: #{tpu_custom_call.1} parent=1 // pred_region
      %40 = dma.done [#allocation3], 256
    $region33: #{tpu_custom_call.1} parent=1 // pred_fallthru
      _
    %v42 = vld [vmem:[%s0] sm:$0xff]
    %v43 = vld [vmem:[%s0 + $0x8] sm:$0xff]
    %v44 = vld [vmem:[%s0 + $0x10] sm:$0xff]
    %v45 = vld [vmem:[%s0 + $0x18] sm:$0xff]
    %v46 = vpack.c.bf16 %v43, %v42
    %v47 = vpack.c.bf16 %v45, %v44
    %v48 = vld [vmem:[%s1] sm:$0xf]
    %v49 = vld [vmem:[%s1 + $0x4] sm:$0xf]
    %v50 = vld [vmem:[%s1 + $0x8] sm:$0xf]
    %v51 = vld [vmem:[%s1 + $0xc] sm:$0xf]
    %v52 = vld [vmem:[%s2] sm:$0xff]
    %v53 = vld [vmem:[%s2 + $0x8] sm:$0xff]
    %v54 = vld [vmem:[%s2 + $0x10] sm:$0xff]
    %v55 = vld [vmem:[%s2 + $0x18] sm:$0xff]
    %57 = vset.pattern.permute.xlu0 0
    %58 = vperm.xlu0 %57, %v52
    %v59 = vpop.permute.xlu0 %58
    %62 = vset.pattern.permute.xlu0 0
    %63 = vperm.xlu0 %62, %v53
    %v64 = vpop.permute.xlu0 %63
    %67 = vset.pattern.permute.xlu0 0
    %68 = vperm.xlu0 %67, %v54
    %v69 = vpop.permute.xlu0 %68
    %72 = vset.pattern.permute.xlu0 0
    %73 = vperm.xlu0 %72, %v55
    %v74 = vpop.permute.xlu0 %73
    %v80 = vunpack.c.l.b16 %v48
    %v81 = vunpack.c.l.b16 %v49
    %v82 = vunpack.c.l.b16 %v50
    %v83 = vunpack.c.l.b16 %v51
    %v84 = vpack.c.b16 %v81, %v80
    %v85 = vpack.c.b16 %v83, %v82
    %vm86 = vcmask 261120
    %v88 = vsel %vm86, %v84, 0
    %v91 = vsel %vm86, %v85, 0
    %93 = vmatprep.subr.bf16.mxu0 0
    %94 = vmatpush1.bf16.msra.mxu0 %v46
    %95 = vmatprep.subr.bf16.mxu0 0
    %96 = vmatpush1.bf16.msra.mxu0 %v47
    %97 = vmatprep.subr.bf16.mxu0 0
    %98 = vmatpush1.bf16.msra.mxu0 0
    %99 = vmatprep.subr.bf16.mxu0 0
    %100 = vmatpush1.bf16.msra.mxu0 0
    %101 = vmatprep.subr.bf16.mxu0 0
    %102 = vmatpush1.bf16.msra.mxu0 0
    %103 = vmatprep.subr.bf16.mxu0 0
    %104 = vmatpush1.bf16.msra.mxu0 0
    %105 = vmatprep.subr.bf16.mxu0 0
    %106 = vmatpush1.bf16.msra.mxu0 0
    %107 = vmatprep.subr.bf16.mxu0 0
    %108 = vmatpush1.bf16.msra.mxu0 0
    %109 = vmatprep.subr.bf16.mxu0 0
    %110 = vmatpush1.bf16.msra.mxu0 0
    %111 = vmatprep.subr.bf16.mxu0 0
    %112 = vmatpush1.bf16.msra.mxu0 0
    %113 = vmatprep.subr.bf16.mxu0 0
    %114 = vmatpush1.bf16.msra.mxu0 0
    %115 = vmatprep.subr.bf16.mxu0 0
    %116 = vmatpush1.bf16.msra.mxu0 0
    %117 = vmatprep.subr.bf16.mxu0 0
    %118 = vmatpush1.bf16.msra.mxu0 0
    %119 = vmatprep.subr.bf16.mxu0 0
    %120 = vmatpush1.bf16.msra.mxu0 0
    %121 = vmatprep.subr.bf16.mxu0 0
    %122 = vmatpush1.bf16.msra.mxu0 0
    %123 = vmatprep.subr.bf16.mxu0 0
    %124 = vmatpush1.bf16.msra.mxu0 0
    %125 = vmatprep.mubr.bf16.mxu0 0
    %126 = vmatmul.mubr.bf16.gmra.mrb[0].mxu0 %v88
    %v127 = vpop.f32.mrb[0].mxu0
    %v128 = vadd.f32 %v59, %v127
    %v129 = vpop.f32.mrb[0].mxu0
    %v130 = vpop.f32.mrb[0].mxu0
    %v131 = vadd.f32 %v64, %v130
    %v132 = vpop.f32.mrb[0].mxu0
    %133 = vmatprep.mubr.bf16.mxu0 0
    %134 = vmatmul.mubr.bf16.gmra.mrb[0].mxu0 %v91
    %v135 = vpop.f32.mrb[0].mxu0
    %v136 = vadd.f32 %v69, %v135
    %v137 = vpop.f32.mrb[0].mxu0
    %v138 = vpop.f32.mrb[0].mxu0
    %v139 = vadd.f32 %v74, %v138
    %v140 = vpop.f32.mrb[0].mxu0
    %141 = vdwg.mxu0
    %v142 = vmax.f32 %v128, 0.0
    %v143 = vmax.f32 %v131, 0.0
    %v144 = vmax.f32 %v136, 0.0
    %v145 = vmax.f32 %v139, 0.0
    %v146 = vld [vmem:[%s3] sm:$0xf]
    %v147 = vld [vmem:[%s3 + $0x4] sm:$0xf]
    %v148 = vld [vmem:[%s3 + $0x8] sm:$0xf]
    %v149 = vld [vmem:[%s3 + $0xc] sm:$0xf]
    %v150 = vpack.c.bf16 %v143, %v142
    %v151 = vpack.c.bf16 %v145, %v144
    %v152 = vld [vmem:[%s4] sm:$0xff]
    %v153 = vld [vmem:[%s4 + $0x8] sm:$0xff]
    %v154 = vld [vmem:[%s4 + $0x10] sm:$0xff]
    %v155 = vld [vmem:[%s4 + $0x18] sm:$0xff]
    %157 = vset.pattern.permute.xlu0 0
    %158 = vperm.xlu0 %157, %v152
    %v159 = vpop.permute.xlu0 %158
    %162 = vset.pattern.permute.xlu0 0
    %163 = vperm.xlu0 %162, %v153
    %v164 = vpop.permute.xlu0 %163
    %167 = vset.pattern.permute.xlu0 0
    %168 = vperm.xlu0 %167, %v154
    %v169 = vpop.permute.xlu0 %168
    %172 = vset.pattern.permute.xlu0 0
    %173 = vperm.xlu0 %172, %v155
    %v174 = vpop.permute.xlu0 %173
    %v180 = vunpack.c.l.b16 %v146
    %v181 = vunpack.c.l.b16 %v147
    %v182 = vunpack.c.l.b16 %v148
    %v183 = vunpack.c.l.b16 %v149
    %v184 = vpack.c.b16 %v181, %v180
    %v185 = vpack.c.b16 %v183, %v182
    %v187 = vsel %vm86, %v184, 0
    %v190 = vsel %vm86, %v185, 0
    %192 = vmatprep.subr.bf16.mxu0 0
    %193 = vmatpush1.bf16.msra.mxu0 %v150
    %194 = vmatprep.subr.bf16.mxu0 0
    %195 = vmatpush1.bf16.msra.mxu0 %v151
    %196 = vmatprep.subr.bf16.mxu0 0
    %197 = vmatpush1.bf16.msra.mxu0 0
    %198 = vmatprep.subr.bf16.mxu0 0
    %199 = vmatpush1.bf16.msra.mxu0 0
    %200 = vmatprep.subr.bf16.mxu0 0
    %201 = vmatpush1.bf16.msra.mxu0 0
    %202 = vmatprep.subr.bf16.mxu0 0
    %203 = vmatpush1.bf16.msra.mxu0 0
    %204 = vmatprep.subr.bf16.mxu0 0
    %205 = vmatpush1.bf16.msra.mxu0 0
    %206 = vmatprep.subr.bf16.mxu0 0
    %207 = vmatpush1.bf16.msra.mxu0 0
    %208 = vmatprep.subr.bf16.mxu0 0
    %209 = vmatpush1.bf16.msra.mxu0 0
    %210 = vmatprep.subr.bf16.mxu0 0
    %211 = vmatpush1.bf16.msra.mxu0 0
    %212 = vmatprep.subr.bf16.mxu0 0
    %213 = vmatpush1.bf16.msra.mxu0 0
    %214 = vmatprep.subr.bf16.mxu0 0
    %215 = vmatpush1.bf16.msra.mxu0 0
    %216 = vmatprep.subr.bf16.mxu0 0
    %217 = vmatpush1.bf16.msra.mxu0 0
    %218 = vmatprep.subr.bf16.mxu0 0
    %219 = vmatpush1.bf16.msra.mxu0 0
    %220 = vmatprep.subr.bf16.mxu0 0
    %221 = vmatpush1.bf16.msra.mxu0 0
    %222 = vmatprep.subr.bf16.mxu0 0
    %223 = vmatpush1.bf16.msra.mxu0 0
    %224 = vmatprep.mubr.bf16.mxu0 0
    %225 = vmatmul.mubr.bf16.gmra.mrb[0].mxu0 %v187
    %v226 = vpop.f32.mrb[0].mxu0
    %v227 = vadd.f32 %v159, %v226
    %v228 = vpop.f32.mrb[0].mxu0
    %v229 = vpop.f32.mrb[0].mxu0
    %v230 = vadd.f32 %v164, %v229
    %v231 = vpop.f32.mrb[0].mxu0
    %232 = vmatprep.mubr.bf16.mxu0 0
    %233 = vmatmul.mubr.bf16.gmra.mrb[0].mxu0 %v190
    %v234 = vpop.f32.mrb[0].mxu0
    %v235 = vadd.f32 %v169, %v234
    %v236 = vpop.f32.mrb[0].mxu0
    %v237 = vpop.f32.mrb[0].mxu0
    %v238 = vadd.f32 %v174, %v237
    %v239 = vpop.f32.mrb[0].mxu0
    %240 = vdwg.mxu0
    %v241 = vld [vmem:[%s5] sm:$0xff]
    %v242 = vld [vmem:[%s5 + $0x8] sm:$0xff]
    %v243 = vld [vmem:[#allocation2] sm:$0xff]
    %v244 = vld [vmem:[#allocation2 + $0x8] sm:$0xff]
    %v245 = vmul.f32 %v227, %v243
    %v246 = vmul.f32 %v230, %v244
    %v247 = vadd.f32 %v241, %v245
    %v248 = vadd.f32 %v242, %v246
    %249 = vst [vmem:[#allocation5] sm:$0xff] %v247
    %250 = vst [vmem:[#allocation5 + $0x8] sm:$0xff] %v248
    %v251 = vmul.f32 %v235, 1.442695
    %v252 = vpow.pop %v251
    %v253 = vmul.f32 %v238, 1.442695
    %v254 = vpow.pop %v253
    %v255 = vmul.f32 %v252, %v243
    %v256 = vmul.f32 %v254, %v244
    %s257 = scalar_lea.vmem [#allocation5], 16
    %258 = vst [vmem:[%s257] sm:$0xff] %v255
    %259 = vst [vmem:[%s257 + $0x8] sm:$0xff] %v256
    // Predicated region
    $region34: #{tpu_custom_call.1} parent=1 // pred_check
      _
    $region35: #{tpu_custom_call.1} parent=1 // pred_check_branch
      %261 = sbr.rel (0) target = $region37
    $region36: #{tpu_custom_call.1} parent=1 // pred_region
      %s263 = ssub.s32 512, 512
      %264 = vsyncadd [#allocation4], %s263
      %s265 = sshll.u32 [#allocation5], 4
      %s266 = int_to_ptr.vmem [resolvable:$true] %s265
      %271 = dma.vmem_to_hbm [thread:$0]  %s266, 512, %s7, [#allocation4], 128, 128, 8
    $region37: #{tpu_custom_call.1} parent=1 // pred_fallthru
      _
    // Predicated region
    $region38: #{tpu_custom_call.1} parent=1 // pred_check
      _
    $region39: #{tpu_custom_call.1} parent=1 // pred_check_branch
      %273 = sbr.rel (0) target = $region41
    $region40: #{tpu_custom_call.1} parent=1 // pred_region
      %274 = dma.done [#allocation4], 512
    $region41: #{tpu_custom_call.1} parent=1 // pred_fallthru
      _
    %275 = vsyncpa [#allocation3], 1
    %276 = vsyncpa [#allocation4], 1

</llo_original>
